<compile_context>
chip_gen: v7x
topology: tpu7x:2x2x1
jax: 0.10.0
libtpu: 0.0.40
codegen_flags: <defaults>
</compile_context>

<pallas_src>
import functools

import jax
import jax.numpy as jnp
from jax.experimental import pallas as pl
from jax.experimental.pallas import tpu as pltpu

_LANE = 128
_SUBLANE = 8


def _round_up(x, m):
    return ((x + m - 1) // m) * m


def _pad_to(a, shape):
    return jnp.pad(a, [(0, t - s) for s, t in zip(a.shape, shape)])


# ----------------------------------------------------------------------------
# Fused Pallas kernel: patch-embed (pooled) -> adapter MLP, and text head.
# ----------------------------------------------------------------------------
def _clip_matting_fused_kernel(Dp, Hp,
                               pooled_ref, cw_ref, w1_ref, w2_ref,
                               tsum_ref, wp_ref, bias_ref,
                               text_ref, prompts_ref):
    # pooled_ref : (Rb, Kp)   sum-over-patches of depth_map patches (zero-padded)
    # cw_ref     : (Kp, Dp)   depth_conv weight, pre-scaled by 1/nP
    # w1_ref     : (Dp, Hp)   depth_adapter fc1
    # w2_ref     : (Hp, Dp)   depth_adapter fc2
    # tsum_ref   : (Rt, Dp)   prompt token-embed sum over sequence
    # wp_ref     : (Dp, Dp)   text projection, pre-scaled by 1/S
    # bias_ref   : (8, Pmax)  packed biases: row0=conv_b, row1=ad_b1,
    #                          row2=ad_b2, row3=txt_bp (zero-padded)
    # text_ref   : (Rb, Dp)   out 0: depth_adapter(depth_vision(depth_map))
    # prompts_ref: (Rt, Dp)   out 1: text_encoder(prompts)
    cb = bias_ref[0:1, 0:Dp]
    b1 = bias_ref[1:2, 0:Hp]
    b2 = bias_ref[2:3, 0:Dp]
    bp = bias_ref[3:4, 0:Dp]

    # depth_vision patch embed on the pre-pooled patches (exact identity:
    # mean_p(X @ W + b) == mean_p(X) @ W + b; 1/nP folded into cw).
    tok = jnp.dot(pooled_ref[...], cw_ref[...],
                  preferred_element_type=jnp.float32) + cb

    # depth_adapter: Linear -> ReLU -> Linear (f32 on MXU/VPU).
    h = jnp.maximum(
        jnp.dot(tok, w1_ref[...], preferred_element_type=jnp.float32) + b1, 0.0)
    text_ref[...] = (
        jnp.dot(h, w2_ref[...], preferred_element_type=jnp.float32) + b2)

    # text_encoder head: pre-reduced token sum (1/S folded into wp) + projection.
    prompts_ref[...] = (
        jnp.dot(tsum_ref[...], wp_ref[...], preferred_element_type=jnp.float32) + bp)


# ----------------------------------------------------------------------------
# One-time parameter preparation (pad / scale / pack).  Call ONCE and cache.
# ----------------------------------------------------------------------------
def prepare_params(params, *, image_hw, seq_len):
    H, W = image_hw
    p = params["patch"]
    D = params["embed_dim"]
    Hid = params["ad_w1"].shape[1]
    K = params["conv_w"].shape[0]
    nP = (H // p) * (W // p)

    Dp = _round_up(D, _LANE)
    Hp = _round_up(Hid, _LANE)
    Kp = _round_up(K, _LANE)
    Pmax = max(Dp, Hp)

    bias_pack = jnp.zeros((_SUBLANE, Pmax), jnp.float32)
    bias_pack = bias_pack.at[0, :D].set(params["conv_b"][0])
    bias_pack = bias_pack.at[1, :Hid].set(params["ad_b1"][0])
    bias_pack = bias_pack.at[2, :D].set(params["ad_b2"][0])
    bias_pack = bias_pack.at[3, :D].set(params["txt_bp"][0])

    return {
        "patch": p, "embed_dim": D, "hidden": Hid, "K": K,
        "nP": nP, "seq_len": seq_len,
        "Dp": Dp, "Hp": Hp, "Kp": Kp, "Pmax": Pmax,
        # 1/nP and 1/S mean scalings folded into the weights (exact in f32).
        "cw": _pad_to(params["conv_w"] * (1.0 / nP), (Kp, Dp)),
        "w1": _pad_to(params["ad_w1"], (Dp, Hp)),
        "w2": _pad_to(params["ad_w2"], (Hp, Dp)),
        "wp": _pad_to(params["txt_wp"] * (1.0 / seq_len), (Dp, Dp)),
        "bias": bias_pack,
        "tok_table": _pad_to(params["tok_table"],
                             (params["tok_table"].shape[0], Dp)),
    }


# ----------------------------------------------------------------------------
# Module-level forward (glue: patch pooling, row padding, token gather+reduce)
# ----------------------------------------------------------------------------
def clip_matting_forward_stage1(prep, depth_map, prompts):
    """depth_map: (B, C, H, W) float32 NCHW; prompts: (Bt, S) int32 tokens."""
    B, C, H, W = depth_map.shape
    p = prep["patch"]
    D = prep["embed_dim"]
    Dp, Hp, Kp, Pmax = prep["Dp"], prep["Hp"], prep["Kp"], prep["Pmax"]
    nH, nW = H // p, W // p
    K = C * p * p
    Bt, S = prompts.shape
    assert K == prep["K"] and nH * nW == prep["nP"] and S == prep["seq_len"], \
        "input shapes must match the shapes used in prepare_params"

    Rb = _round_up(B, _SUBLANE)
    Rt = _round_up(Bt, _SUBLANE)

    # Pool-before-matmul: sum each within-patch pixel position over all
    # patches, reducing the W-contiguous axis first (lane-friendlier order).
    pooled = (depth_map.reshape(B, C, nH, p, nW, p)
              .sum(axis=4).sum(axis=2).reshape(B, K))
    pooled_p = _pad_to(pooled, (Rb, Kp))

    # Token-embedding lookup + sequence pre-reduction stay in the wrapper
    # (gather glue; 1/S already folded into wp).
    tok_emb = jnp.take(prep["tok_table"], prompts, axis=0)      # (Bt, S, Dp)
    tsum_p = _pad_to(tok_emb.sum(axis=1), (Rt, Dp))             # (Rt, Dp)

    flops = int(2 * (Rb * Kp * Dp + Rb * Dp * Hp + Rb * Hp * Dp + Rt * Dp * Dp))
    bytes_accessed = int(4 * (Rb * Kp + Kp * Dp + Dp * Hp + Hp * Dp +
                              Rt * Dp + Dp * Dp + _SUBLANE * Pmax +
                              Rb * Dp + Rt * Dp))

    vmem = pl.BlockSpec(memory_space=pltpu.MemorySpace.VMEM)
    kernel = functools.partial(_clip_matting_fused_kernel, Dp, Hp)
    text_pad, prompts_pad = pl.pallas_call(
        kernel,
        out_shape=(jax.ShapeDtypeStruct((Rb, Dp), jnp.float32),
                   jax.ShapeDtypeStruct((Rt, Dp), jnp.float32)),
        in_specs=[vmem] * 7,
        out_specs=(vmem, vmem),
        cost_estimate=pl.CostEstimate(flops=flops, transcendentals=0,
                                      bytes_accessed=bytes_accessed),
    )(pooled_p, prep["cw"], prep["w1"], prep["w2"], tsum_p, prep["wp"],
      prep["bias"])

    # Padded rows (>= B / >= Bt) contain bias-propagated garbage; always slice.
    return text_pad[:B, :D], prompts_pad[:Bt, :D]


# ----------------------------------------------------------------------------
# Plain-JAX reference with the ORIGINAL data-flow (per-patch embed, pool in
# adapter, per-token embed, pool in text head) to verify the rewrites.
# ----------------------------------------------------------------------------
def reference_forward(params, depth_map, prompts):
    B, C, H, W = depth_map.shape
    p = params["patch"]
    nH, nW = H // p, W // p
    nP = nH * nW
    x = depth_map.reshape(B, C, nH, p, nW, p)
    x = jnp.transpose(x, (0, 2, 4, 1, 3, 5)).reshape(B * nP, C * p * p)
    tok = x @ params["conv_w"] + params["conv_b"]
    depth_tokens = tok.reshape(B, nP, params["embed_dim"])
    pooled = depth_tokens.mean(axis=1)
    h = jnp.maximum(pooled @ params["ad_w1"] + params["ad_b1"], 0.0)
    text_embed = h @ params["ad_w2"] + params["ad_b2"]
    tok_emb = jnp.take(params["tok_table"], prompts, axis=0)
    prompts_embed = tok_emb.mean(axis=1) @ params["txt_wp"] + params["txt_bp"]
    return text_embed, prompts_embed


# ----------------------------------------------------------------------------
# Deterministic parameter construction
# ----------------------------------------------------------------------------
def make_params(key, *, in_ch=1, patch=8, embed_dim=32, adapter_hidden=64,
                vocab=64):
    ks = jax.random.split(key, 8)
    K = in_ch * patch * patch
    return {
        "patch": patch,
        "embed_dim": embed_dim,
        # depth_vision.depth_conv: Conv2d(in_ch, embed_dim, k=patch, s=patch)
        # stored pre-flattened as (C*p*p, D) to match the patch layout.
        "conv_w": 0.05 * jax.random.normal(ks[0], (K, embed_dim), jnp.float32),
        "conv_b": 0.01 * jax.random.normal(ks[1], (1, embed_dim), jnp.float32),
        # depth_adapter MLP
        "ad_w1": 0.05 * jax.random.normal(ks[2], (embed_dim, adapter_hidden), jnp.float32),
        "ad_b1": 0.01 * jax.random.normal(ks[3], (1, adapter_hidden), jnp.float32),
        "ad_w2": 0.05 * jax.random.normal(ks[4], (adapter_hidden, embed_dim), jnp.float32),
        "ad_b2": 0.01 * jax.random.normal(ks[5], (1, embed_dim), jnp.float32),
        # text_encoder: token table + output projection
        "tok_table": 0.05 * jax.random.normal(ks[6], (vocab, embed_dim), jnp.float32),
        "txt_wp": 0.05 * jax.random.normal(ks[7], (embed_dim, embed_dim), jnp.float32),
        "txt_bp": jnp.zeros((1, embed_dim), jnp.float32),
    }


if __name__ == "__main__":
    key = jax.random.PRNGKey(0)
    kp, kd, kt = jax.random.split(key, 3)

    params = make_params(kp)

    B, H, W = 2, 16, 16
    seq = 8
    depth_map = jax.random.normal(kd, (B, 1, H, W), jnp.float32)  # NCHW
    prompts = jax.random.randint(kt, (B, seq), 0, 64, jnp.int32)

    # One-time prep: pad, scale-fold, bias-pack.  Cached across forwards.
    prep = prepare_params(params, image_hw=(H, W), seq_len=seq)
    prep = jax.device_put(prep)

    text_embed, prompts_embed = clip_matting_forward_stage1(prep, depth_map, prompts)
    jax.block_until_ready((text_embed, prompts_embed))

    ref_text, ref_prompts = reference_forward(params, depth_map, prompts)
    assert text_embed.shape == (B, 32) and prompts_embed.shape == (B, 32)
    assert jnp.allclose(text_embed, ref_text, atol=1e-4, rtol=1e-4)
    assert jnp.allclose(prompts_embed, ref_prompts, atol=1e-4, rtol=1e-4)

    print("KERNEL_OK")
</pallas_src>

<mosaic_0001>
module attributes {stable_mosaic.version = 11 : i64} {
  func.func @_clip_matting_fused_kernel(%arg0: memref<8x128xf32, #tpu.memory_space<vmem>>, %arg1: memref<128x128xf32, #tpu.memory_space<vmem>>, %arg2: memref<128x128xf32, #tpu.memory_space<vmem>>, %arg3: memref<128x128xf32, #tpu.memory_space<vmem>>, %arg4: memref<8x128xf32, #tpu.memory_space<vmem>>, %arg5: memref<128x128xf32, #tpu.memory_space<vmem>>, %arg6: memref<8x128xf32, #tpu.memory_space<vmem>>, %arg7: memref<8x128xf32, #tpu.memory_space<vmem>>, %arg8: memref<8x128xf32, #tpu.memory_space<vmem>>) attributes {dimension_semantics = [], scalar_prefetch = 0 : i64, scratch_operands = 0 : i64, tpu.core_type = #tpu.core_type<tc>} {
    %c0 = arith.constant 0 : index
    %c0_0 = arith.constant 0 : index
    %0 = vector.load %arg6[%c0, %c0_0] : memref<8x128xf32, #tpu.memory_space<vmem>>, vector<1x128xf32>
    %c1 = arith.constant 1 : index
    %c0_1 = arith.constant 0 : index
    %1 = vector.load %arg6[%c1, %c0_1] : memref<8x128xf32, #tpu.memory_space<vmem>>, vector<1x128xf32>
    %c2 = arith.constant 2 : index
    %c0_2 = arith.constant 0 : index
    %2 = vector.load %arg6[%c2, %c0_2] : memref<8x128xf32, #tpu.memory_space<vmem>>, vector<1x128xf32>
    %c3 = arith.constant 3 : index
    %c0_3 = arith.constant 0 : index
    %3 = vector.load %arg6[%c3, %c0_3] : memref<8x128xf32, #tpu.memory_space<vmem>>, vector<1x128xf32>
    %c0_4 = arith.constant 0 : index
    %c0_5 = arith.constant 0 : index
    %4 = vector.load %arg0[%c0_4, %c0_5] : memref<8x128xf32, #tpu.memory_space<vmem>>, vector<8x128xf32>
    %c0_6 = arith.constant 0 : index
    %c0_7 = arith.constant 0 : index
    %5 = vector.load %arg1[%c0_6, %c0_7] : memref<128x128xf32, #tpu.memory_space<vmem>>, vector<128x128xf32>
    %cst = arith.constant dense<0.000000e+00> : vector<8x128xf32>
    %6 = tpu.matmul %4, %5, %cst {dimension_numbers = #tpu.dot_dimension_numbers<[1], [0], [0], [1], [0, 0, 1, 1], [], []>} : vector<8x128xf32>, vector<128x128xf32>, vector<8x128xf32> -> vector<8x128xf32>
    %7 = vector.broadcast %0 : vector<1x128xf32> to vector<8x128xf32>
    %8 = arith.addf %6, %7 : vector<8x128xf32>
    %c0_8 = arith.constant 0 : index
    %c0_9 = arith.constant 0 : index
    %9 = vector.load %arg2[%c0_8, %c0_9] : memref<128x128xf32, #tpu.memory_space<vmem>>, vector<128x128xf32>
    %cst_10 = arith.constant dense<0.000000e+00> : vector<8x128xf32>
    %10 = tpu.matmul %8, %9, %cst_10 {dimension_numbers = #tpu.dot_dimension_numbers<[1], [0], [0], [1], [0, 0, 1, 1], [], []>} : vector<8x128xf32>, vector<128x128xf32>, vector<8x128xf32> -> vector<8x128xf32>
    %11 = vector.broadcast %1 : vector<1x128xf32> to vector<8x128xf32>
    %12 = arith.addf %10, %11 : vector<8x128xf32>
    %cst_11 = arith.constant 0.000000e+00 : f32
    %13 = vector.broadcast %cst_11 : f32 to vector<8x128xf32>
    %14 = arith.maximumf %12, %13 : vector<8x128xf32>
    %c0_12 = arith.constant 0 : index
    %c0_13 = arith.constant 0 : index
    %15 = vector.load %arg3[%c0_12, %c0_13] : memref<128x128xf32, #tpu.memory_space<vmem>>, vector<128x128xf32>
    %cst_14 = arith.constant dense<0.000000e+00> : vector<8x128xf32>
    %16 = tpu.matmul %14, %15, %cst_14 {dimension_numbers = #tpu.dot_dimension_numbers<[1], [0], [0], [1], [0, 0, 1, 1], [], []>} : vector<8x128xf32>, vector<128x128xf32>, vector<8x128xf32> -> vector<8x128xf32>
    %17 = vector.broadcast %2 : vector<1x128xf32> to vector<8x128xf32>
    %18 = arith.addf %16, %17 : vector<8x128xf32>
    %c0_15 = arith.constant 0 : index
    %c0_16 = arith.constant 0 : index
    %19 = vector.load %arg7[%c0_15, %c0_16] : memref<8x128xf32, #tpu.memory_space<vmem>>, vector<8x128xf32>
    tpu.vector_store %arg7[%c0_15, %c0_16], %18 {strides = array<i32>} : memref<8x128xf32, #tpu.memory_space<vmem>>, vector<8x128xf32>,
    %c0_17 = arith.constant 0 : index
    %c0_18 = arith.constant 0 : index
    %20 = vector.load %arg4[%c0_17, %c0_18] : memref<8x128xf32, #tpu.memory_space<vmem>>, vector<8x128xf32>
    %c0_19 = arith.constant 0 : index
    %c0_20 = arith.constant 0 : index
    %21 = vector.load %arg5[%c0_19, %c0_20] : memref<128x128xf32, #tpu.memory_space<vmem>>, vector<128x128xf32>
    %cst_21 = arith.constant dense<0.000000e+00> : vector<8x128xf32>
    %22 = tpu.matmul %20, %21, %cst_21 {dimension_numbers = #tpu.dot_dimension_numbers<[1], [0], [0], [1], [0, 0, 1, 1], [], []>} : vector<8x128xf32>, vector<128x128xf32>, vector<8x128xf32> -> vector<8x128xf32>
    %23 = vector.broadcast %3 : vector<1x128xf32> to vector<8x128xf32>
    %24 = arith.addf %22, %23 : vector<8x128xf32>
    %c0_22 = arith.constant 0 : index
    %c0_23 = arith.constant 0 : index
    %25 = vector.load %arg8[%c0_22, %c0_23] : memref<8x128xf32, #tpu.memory_space<vmem>>, vector<8x128xf32>
    tpu.vector_store %arg8[%c0_22, %c0_23], %24 {strides = array<i32>} : memref<8x128xf32, #tpu.memory_space<vmem>>, vector<8x128xf32>,
    return
  }
}

</mosaic_0001>

<llo_original>
// kernel: tpu_custom_call.1
$region0: #{tpu_custom_call.1}
  #allocation0 [shape = 'u32[]', space=smem, size = 0x4, offset = 0x4, fixed_abs, tag = 'smem constant byte address 0x4 - core index']
  #allocation1 [shape = 'u32[144,128]{1,0:T(1,128)}', space=vmem, size = 0x12000, scoped, tag = 'internal scratch']
  %s0 = inlined_call_operand.hbm [shape: f32[8,128], index: 0, kind: input, shape index: {}]
  %s1 = inlined_call_operand.hbm [shape: f32[128,128], index: 1, kind: input, shape index: {}]
  %s2 = inlined_call_operand.hbm [shape: f32[128,128], index: 2, kind: input, shape index: {}]
  %s3 = inlined_call_operand.hbm [shape: f32[128,128], index: 3, kind: input, shape index: {}]
  %s4 = inlined_call_operand.vmem [shape: f32[8,128], index: 4, kind: input, shape index: {}]
  %s5 = inlined_call_operand.hbm [shape: f32[128,128], index: 5, kind: input, shape index: {}]
  %s6 = inlined_call_operand.vmem [shape: f32[8,128], index: 6, kind: input, shape index: {}]
  %s7 = inlined_call_operand.hbm [shape: f32[8,128], index: 7, kind: output, shape index: {0}]
  %s8 = inlined_call_operand.hbm [shape: f32[8,128], index: 8, kind: output, shape index: {1}]
  %9 = xla_tuple %s7, %s8
  %s10 = sld [smem:[#allocation0]]
  $region66: #{tpu_custom_call.1} parent=0
    _
  %s12 = ssub.s32 1, %s10
  %s13 = scalar_select 0, %s12, %s10
  $region1: #{tpu_custom_call.1} parent=0
    #allocation2 [shape = 'u8[4096]{0}', space=vmem, size = 0x1000, scoped, tag = 'input window, operand 0, single buffered']
    #allocation3 [shape = 's32[1]{0}', space=sflag, size = 0x4, scoped, tag = 'scoped memory for tpu_custom_call.1']
    #allocation4 [shape = 's32[1]{0}', space=sflag, size = 0x4, scoped, tag = 'scoped memory for tpu_custom_call.1']
    #allocation5 [shape = 'u8[65536]{0}', space=vmem, size = 0x10000, scoped, tag = 'input window, operand 1, single buffered']
    #allocation6 [shape = 's32[1]{0}', space=sflag, size = 0x4, scoped, tag = 'scoped memory for tpu_custom_call.1']
    #allocation7 [shape = 'u8[65536]{0}', space=vmem, size = 0x10000, scoped, tag = 'input window, operand 2, single buffered']
    #allocation8 [shape = 'u8[65536]{0}', space=vmem, size = 0x10000, scoped, tag = 'input window, operand 3, single buffered']
    #allocation9 [shape = 's32[1]{0}', space=sflag, size = 0x4, scoped, tag = 'scoped memory for tpu_custom_call.1']
    #allocation10 [shape = 'u8[65536]{0}', space=vmem, size = 0x10000, scoped, tag = 'input window, operand 5, single buffered']
    #allocation11 [shape = 'u8[4096]{0}', space=vmem, size = 0x1000, scoped, tag = 'output window, operand 0, single buffered']
    #allocation12 [shape = 'u8[4096]{0}', space=vmem, size = 0x1000, scoped, tag = 'output window, operand 1, single buffered']
    #allocation13 [shape = 's32[1]{0}', space=sflag, size = 0x4, scoped, tag = 'scoped memory for tpu_custom_call.1']
    %14 = vsyncpa [#allocation3], 0
    %15 = vsyncpa [#allocation6], 0
    %16 = vsyncpa [#allocation9], 0
    %17 = vsyncpa [#allocation4], 0
    %18 = vsyncpa [#allocation13], 0
    // Predicated region
    $region2: #{tpu_custom_call.1} parent=1 // pred_check
      _
    $region3: #{tpu_custom_call.1} parent=1 // pred_check_branch
      %20 = sbr.rel (0) target = $region5
    $region4: #{tpu_custom_call.1} parent=1 // pred_region
      %s22 = ssub.s32 128, 128
      %23 = vsyncadd [#allocation3], %s22
      %s25 = sshll.u32 [#allocation2], 4
      %s26 = int_to_ptr.vmem [resolvable:$true] %s25
      %28 = dma.hbm_to_vmem [thread:$0]  %s0, 128, %s26, [#allocation3]
    $region5: #{tpu_custom_call.1} parent=1 // pred_fallthru
      _
    // Predicated region
    $region6: #{tpu_custom_call.1} parent=1 // pred_check
      _
    $region7: #{tpu_custom_call.1} parent=1 // pred_check_branch
      %30 = sbr.rel (0) target = $region9
    $region8: #{tpu_custom_call.1} parent=1 // pred_region
      %s32 = ssub.s32 2048, 2048
      %33 = vsyncadd [#allocation6], %s32
      %s34 = sshll.u32 [#allocation5], 4
      %s35 = int_to_ptr.vmem [resolvable:$true] %s34
      %40 = dma.hbm_to_vmem [thread:$0]  %s1, 2048, %s35, [#allocation6], 128, 128, 8
    $region9: #{tpu_custom_call.1} parent=1 // pred_fallthru
      _
    // Predicated region
    $region10: #{tpu_custom_call.1} parent=1 // pred_check
      _
    $region11: #{tpu_custom_call.1} parent=1 // pred_check_branch
      %42 = sbr.rel (0) target = $region13
    $region12: #{tpu_custom_call.1} parent=1 // pred_region
      %s44 = ssub.s32 2048, 2048
      %45 = vsyncadd [#allocation6], %s44
      %s46 = sshll.u32 [#allocation7], 4
      %s47 = int_to_ptr.vmem [resolvable:$true] %s46
      %52 = dma.hbm_to_vmem [thread:$0]  %s2, 2048, %s47, [#allocation6], 128, 128, 8
    $region13: #{tpu_custom_call.1} parent=1 // pred_fallthru
      _
    // Predicated region
    $region14: #{tpu_custom_call.1} parent=1 // pred_check
      _
    $region15: #{tpu_custom_call.1} parent=1 // pred_check_branch
      %54 = sbr.rel (0) target = $region17
    $region16: #{tpu_custom_call.1} parent=1 // pred_region
      %s56 = ssub.s32 2048, 2048
      %57 = vsyncadd [#allocation9], %s56
      %s58 = sshll.u32 [#allocation8], 4
      %s59 = int_to_ptr.vmem [resolvable:$true] %s58
      %64 = dma.hbm_to_vmem [thread:$0]  %s3, 2048, %s59, [#allocation9], 128, 128, 8
    $region17: #{tpu_custom_call.1} parent=1 // pred_fallthru
      _
    // Predicated region
    $region18: #{tpu_custom_call.1} parent=1 // pred_check
      _
    $region19: #{tpu_custom_call.1} parent=1 // pred_check_branch
      %66 = sbr.rel (0) target = $region21
    $region20: #{tpu_custom_call.1} parent=1 // pred_region
      _
    $region21: #{tpu_custom_call.1} parent=1 // pred_fallthru
      _
    // Predicated region
    $region22: #{tpu_custom_call.1} parent=1 // pred_check
      _
    $region23: #{tpu_custom_call.1} parent=1 // pred_check_branch
      %68 = sbr.rel (0) target = $region25
    $region24: #{tpu_custom_call.1} parent=1 // pred_region
      %s70 = ssub.s32 2048, 2048
      %71 = vsyncadd [#allocation9], %s70
      %s72 = sshll.u32 [#allocation10], 4
      %s73 = int_to_ptr.vmem [resolvable:$true] %s72
      %78 = dma.hbm_to_vmem [thread:$0]  %s5, 2048, %s73, [#allocation9], 128, 128, 8
    $region25: #{tpu_custom_call.1} parent=1 // pred_fallthru
      _
    // Predicated region
    $region26: #{tpu_custom_call.1} parent=1 // pred_check
      _
    $region27: #{tpu_custom_call.1} parent=1 // pred_check_branch
      %80 = sbr.rel (0) target = $region29
    $region28: #{tpu_custom_call.1} parent=1 // pred_region
      _
    $region29: #{tpu_custom_call.1} parent=1 // pred_fallthru
      _
    // Predicated region
    $region30: #{tpu_custom_call.1} parent=1 // pred_check
      _
    $region31: #{tpu_custom_call.1} parent=1 // pred_check_branch
      %82 = sbr.rel (0) target = $region33
    $region32: #{tpu_custom_call.1} parent=1 // pred_region
      %83 = dma.done [#allocation3], 128
    $region33: #{tpu_custom_call.1} parent=1 // pred_fallthru
      _
    // Predicated region
    $region34: #{tpu_custom_call.1} parent=1 // pred_check
      _
    $region35: #{tpu_custom_call.1} parent=1 // pred_check_branch
      %85 = sbr.rel (0) target = $region37
    $region36: #{tpu_custom_call.1} parent=1 // pred_region
      %86 = dma.done [#allocation6], 2048
    $region37: #{tpu_custom_call.1} parent=1 // pred_fallthru
      _
    // Predicated region
    $region38: #{tpu_custom_call.1} parent=1 // pred_check
      _
    $region39: #{tpu_custom_call.1} parent=1 // pred_check_branch
      %88 = sbr.rel (0) target = $region41
    $region40: #{tpu_custom_call.1} parent=1 // pred_region
      %89 = dma.done [#allocation6], 2048
    $region41: #{tpu_custom_call.1} parent=1 // pred_fallthru
      _
    // Predicated region
    $region42: #{tpu_custom_call.1} parent=1 // pred_check
      _
    $region43: #{tpu_custom_call.1} parent=1 // pred_check_branch
      %91 = sbr.rel (0) target = $region45
    $region44: #{tpu_custom_call.1} parent=1 // pred_region
      %92 = dma.done [#allocation9], 2048
    $region45: #{tpu_custom_call.1} parent=1 // pred_fallthru
      _
    // Predicated region
    $region46: #{tpu_custom_call.1} parent=1 // pred_check
      _
    $region47: #{tpu_custom_call.1} parent=1 // pred_check_branch
      %94 = sbr.rel (0) target = $region49
    $region48: #{tpu_custom_call.1} parent=1 // pred_region
      %95 = dma.done [#allocation9], 2048
    $region49: #{tpu_custom_call.1} parent=1 // pred_fallthru
      _
    %v96 = vld [vmem:[%s6] sm:$0x1]
    %v97 = vld [vmem:[%s6 + $0x1] sm:$0x1]
    %v98 = vld [vmem:[%s6 + $0x2] sm:$0x1]
    %v99 = vld [vmem:[%s6 + $0x3] sm:$0x1]
    %v100 = vld [vmem:[#allocation2] sm:$0xff]
    %v101 = vld [vmem:[#allocation5] sm:$0xff]
    %v102 = vld [vmem:[#allocation5 + $0x8] sm:$0xff]
    %v103 = vld [vmem:[#allocation5 + $0x10] sm:$0xff]
    %v104 = vld [vmem:[#allocation5 + $0x18] sm:$0xff]
    %v105 = vld [vmem:[#allocation5 + $0x20] sm:$0xff]
    %v106 = vld [vmem:[#allocation5 + $0x28] sm:$0xff]
    %v107 = vld [vmem:[#allocation5 + $0x30] sm:$0xff]
    %v108 = vld [vmem:[#allocation5 + $0x38] sm:$0xff]
    %v109 = vld [vmem:[#allocation5 + $0x40] sm:$0xff]
    %v110 = vld [vmem:[#allocation5 + $0x48] sm:$0xff]
    %v111 = vld [vmem:[#allocation5 + $0x50] sm:$0xff]
    %v112 = vld [vmem:[#allocation5 + $0x58] sm:$0xff]
    %v113 = vld [vmem:[#allocation5 + $0x60] sm:$0xff]
    %v114 = vld [vmem:[#allocation5 + $0x68] sm:$0xff]
    %v115 = vld [vmem:[#allocation5 + $0x70] sm:$0xff]
    %v116 = vld [vmem:[#allocation5 + $0x78] sm:$0xff]
    %v117 = vlaneseq
    %v118 = vshrl.u32 %v117, 7
    %v119 = vsub.s32 0, %v118
    %v120 = vrot.slane %v96, %v119
    %121 = vmatprep.subr.mxu0 0.0
    %122 = vmatpush1.msra.mxu0 %v101
    %123 = vmatprep.subr.mxu0 0.0
    %124 = vmatpush1.msra.mxu0 %v102
    %125 = vmatprep.subr.mxu0 0.0
    %126 = vmatpush1.msra.mxu0 %v103
    %127 = vmatprep.subr.mxu0 0.0
    %128 = vmatpush1.msra.mxu0 %v104
    %129 = vmatprep.subr.mxu0 0.0
    %130 = vmatpush1.msra.mxu0 %v105
    %131 = vmatprep.subr.mxu0 0.0
    %132 = vmatpush1.msra.mxu0 %v106
    %133 = vmatprep.subr.mxu0 0.0
    %134 = vmatpush1.msra.mxu0 %v107
    %135 = vmatprep.subr.mxu0 0.0
    %136 = vmatpush1.msra.mxu0 %v108
    %137 = vmatprep.subr.mxu0 0.0
    %138 = vmatpush1.msra.mxu0 %v109
    %139 = vmatprep.subr.mxu0 0.0
    %140 = vmatpush1.msra.mxu0 %v110
    %141 = vmatprep.subr.mxu0 0.0
    %142 = vmatpush1.msra.mxu0 %v111
    %143 = vmatprep.subr.mxu0 0.0
    %144 = vmatpush1.msra.mxu0 %v112
    %145 = vmatprep.subr.mxu0 0.0
    %146 = vmatpush1.msra.mxu0 %v113
    %147 = vmatprep.subr.mxu0 0.0
    %148 = vmatpush1.msra.mxu0 %v114
    %149 = vmatprep.subr.mxu0 0.0
    %150 = vmatpush1.msra.mxu0 %v115
    %151 = vmatprep.subr.mxu0 0.0
    %152 = vmatpush1.msra.mxu0 %v116
    %153 = vmatprep.subr.mxu0 0.0
    %154 = vmatpush1.msra.mxu0 0.0
    %155 = vmatprep.subr.mxu0 0.0
    %156 = vmatpush1.msra.mxu0 0.0
    %157 = vmatprep.subr.mxu0 0.0
    %158 = vmatpush1.msra.mxu0 0.0
    %159 = vmatprep.subr.mxu0 0.0
    %160 = vmatpush1.msra.mxu0 0.0
    %161 = vmatprep.subr.mxu0 0.0
    %162 = vmatpush1.msra.mxu0 0.0
    %163 = vmatprep.subr.mxu0 0.0
    %164 = vmatpush1.msra.mxu0 0.0
    %165 = vmatprep.subr.mxu0 0.0
    %166 = vmatpush1.msra.mxu0 0.0
    %167 = vmatprep.subr.mxu0 0.0
    %168 = vmatpush1.msra.mxu0 0.0
    %169 = vmatprep.subr.mxu0 0.0
    %170 = vmatpush1.msra.mxu0 0.0
    %171 = vmatprep.subr.mxu0 0.0
    %172 = vmatpush1.msra.mxu0 0.0
    %173 = vmatprep.subr.mxu0 0.0
    %174 = vmatpush1.msra.mxu0 0.0
    %175 = vmatprep.subr.mxu0 0.0
    %176 = vmatpush1.msra.mxu0 0.0
    %177 = vmatprep.subr.mxu0 0.0
    %178 = vmatpush1.msra.mxu0 0.0
    %179 = vmatprep.subr.mxu0 0.0
    %180 = vmatpush1.msra.mxu0 0.0
    %181 = vmatprep.subr.mxu0 0.0
    %182 = vmatpush1.msra.mxu0 0.0
    %183 = vmatprep.subr.mxu0 0.0
    %184 = vmatpush1.msra.mxu0 0.0
    %185 = vmatprep.mubr.f32.mxu0 0.0
    %186 = vmatmul.mubr.f32.gmra.mrb[0].mxu0 %v100
    %v187 = vpop.f32.mrb[0].mxu0
    %v188 = vadd.f32 %v120, %v187
    %v189 = vpop.f32.mrb[0].mxu0
    %190 = vdwg.mxu0
    %v191 = vld [vmem:[#allocation7] sm:$0xff]
    %v192 = vld [vmem:[#allocation7 + $0x8] sm:$0xff]
    %v193 = vld [vmem:[#allocation7 + $0x10] sm:$0xff]
    %v194 = vld [vmem:[#allocation7 + $0x18] sm:$0xff]
    %v195 = vld [vmem:[#allocation7 + $0x20] sm:$0xff]
    %v196 = vld [vmem:[#allocation7 + $0x28] sm:$0xff]
    %v197 = vld [vmem:[#allocation7 + $0x30] sm:$0xff]
    %v198 = vld [vmem:[#allocation7 + $0x38] sm:$0xff]
    %v199 = vld [vmem:[#allocation7 + $0x40] sm:$0xff]
    %v200 = vld [vmem:[#allocation7 + $0x48] sm:$0xff]
    %v201 = vld [vmem:[#allocation7 + $0x50] sm:$0xff]
    %v202 = vld [vmem:[#allocation7 + $0x58] sm:$0xff]
    %v203 = vld [vmem:[#allocation7 + $0x60] sm:$0xff]
    %v204 = vld [vmem:[#allocation7 + $0x68] sm:$0xff]
    %v205 = vld [vmem:[#allocation7 + $0x70] sm:$0xff]
    %v206 = vld [vmem:[#allocation7 + $0x78] sm:$0xff]
    %v207 = vlaneseq
    %v208 = vshrl.u32 %v207, 7
    %v209 = vsub.s32 0, %v208
    %v210 = vrot.slane %v97, %v209
    %211 = vmatprep.subr.mxu0 0.0
    %212 = vmatpush1.msra.mxu0 %v191
    %213 = vmatprep.subr.mxu0 0.0
    %214 = vmatpush1.msra.mxu0 %v192
    %215 = vmatprep.subr.mxu0 0.0
    %216 = vmatpush1.msra.mxu0 %v193
    %217 = vmatprep.subr.mxu0 0.0
    %218 = vmatpush1.msra.mxu0 %v194
    %219 = vmatprep.subr.mxu0 0.0
    %220 = vmatpush1.msra.mxu0 %v195
    %221 = vmatprep.subr.mxu0 0.0
    %222 = vmatpush1.msra.mxu0 %v196
    %223 = vmatprep.subr.mxu0 0.0
    %224 = vmatpush1.msra.mxu0 %v197
    %225 = vmatprep.subr.mxu0 0.0
    %226 = vmatpush1.msra.mxu0 %v198
    %227 = vmatprep.subr.mxu0 0.0
    %228 = vmatpush1.msra.mxu0 %v199
    %229 = vmatprep.subr.mxu0 0.0
    %230 = vmatpush1.msra.mxu0 %v200
    %231 = vmatprep.subr.mxu0 0.0
    %232 = vmatpush1.msra.mxu0 %v201
    %233 = vmatprep.subr.mxu0 0.0
    %234 = vmatpush1.msra.mxu0 %v202
    %235 = vmatprep.subr.mxu0 0.0
    %236 = vmatpush1.msra.mxu0 %v203
    %237 = vmatprep.subr.mxu0 0.0
    %238 = vmatpush1.msra.mxu0 %v204
    %239 = vmatprep.subr.mxu0 0.0
    %240 = vmatpush1.msra.mxu0 %v205
    %241 = vmatprep.subr.mxu0 0.0
    %242 = vmatpush1.msra.mxu0 %v206
    %243 = vmatprep.subr.mxu0 0.0
    %244 = vmatpush1.msra.mxu0 0.0
    %245 = vmatprep.subr.mxu0 0.0
    %246 = vmatpush1.msra.mxu0 0.0
    %247 = vmatprep.subr.mxu0 0.0
    %248 = vmatpush1.msra.mxu0 0.0
    %249 = vmatprep.subr.mxu0 0.0
    %250 = vmatpush1.msra.mxu0 0.0
    %251 = vmatprep.subr.mxu0 0.0
    %252 = vmatpush1.msra.mxu0 0.0
    %253 = vmatprep.subr.mxu0 0.0
    %254 = vmatpush1.msra.mxu0 0.0
    %255 = vmatprep.subr.mxu0 0.0
    %256 = vmatpush1.msra.mxu0 0.0
    %257 = vmatprep.subr.mxu0 0.0
    %258 = vmatpush1.msra.mxu0 0.0
    %259 = vmatprep.subr.mxu0 0.0
    %260 = vmatpush1.msra.mxu0 0.0
    %261 = vmatprep.subr.mxu0 0.0
    %262 = vmatpush1.msra.mxu0 0.0
    %263 = vmatprep.subr.mxu0 0.0
    %264 = vmatpush1.msra.mxu0 0.0
    %265 = vmatprep.subr.mxu0 0.0
    %266 = vmatpush1.msra.mxu0 0.0
    %267 = vmatprep.subr.mxu0 0.0
    %268 = vmatpush1.msra.mxu0 0.0
    %269 = vmatprep.subr.mxu0 0.0
    %270 = vmatpush1.msra.mxu0 0.0
    %271 = vmatprep.subr.mxu0 0.0
    %272 = vmatpush1.msra.mxu0 0.0
    %273 = vmatprep.subr.mxu0 0.0
    %274 = vmatpush1.msra.mxu0 0.0
    %275 = vmatprep.mubr.f32.mxu0 0.0
    %276 = vmatmul.mubr.f32.gmra.mrb[0].mxu0 %v188
    %v277 = vpop.f32.mrb[0].mxu0
    %v278 = vadd.f32 %v210, %v277
    %v279 = vpop.f32.mrb[0].mxu0
    %280 = vdwg.mxu0
    %v281 = vmax.f32 %v278, 0.0
    %v282 = vld [vmem:[#allocation8] sm:$0xff]
    %v283 = vld [vmem:[#allocation8 + $0x8] sm:$0xff]
    %v284 = vld [vmem:[#allocation8 + $0x10] sm:$0xff]
    %v285 = vld [vmem:[#allocation8 + $0x18] sm:$0xff]
    %v286 = vld [vmem:[#allocation8 + $0x20] sm:$0xff]
    %v287 = vld [vmem:[#allocation8 + $0x28] sm:$0xff]
    %v288 = vld [vmem:[#allocation8 + $0x30] sm:$0xff]
    %v289 = vld [vmem:[#allocation8 + $0x38] sm:$0xff]
    %v290 = vld [vmem:[#allocation8 + $0x40] sm:$0xff]
    %v291 = vld [vmem:[#allocation8 + $0x48] sm:$0xff]
    %v292 = vld [vmem:[#allocation8 + $0x50] sm:$0xff]
    %v293 = vld [vmem:[#allocation8 + $0x58] sm:$0xff]
    %v294 = vld [vmem:[#allocation8 + $0x60] sm:$0xff]
    %v295 = vld [vmem:[#allocation8 + $0x68] sm:$0xff]
    %v296 = vld [vmem:[#allocation8 + $0x70] sm:$0xff]
    %v297 = vld [vmem:[#allocation8 + $0x78] sm:$0xff]
    %v298 = vlaneseq
    %v299 = vshrl.u32 %v298, 7
    %v300 = vsub.s32 0, %v299
    %v301 = vrot.slane %v98, %v300
    %302 = vmatprep.subr.mxu0 0.0
    %303 = vmatpush1.msra.mxu0 %v282
    %304 = vmatprep.subr.mxu0 0.0
    %305 = vmatpush1.msra.mxu0 %v283
    %306 = vmatprep.subr.mxu0 0.0
    %307 = vmatpush1.msra.mxu0 %v284
    %308 = vmatprep.subr.mxu0 0.0
    %309 = vmatpush1.msra.mxu0 %v285
    %310 = vmatprep.subr.mxu0 0.0
    %311 = vmatpush1.msra.mxu0 %v286
    %312 = vmatprep.subr.mxu0 0.0
    %313 = vmatpush1.msra.mxu0 %v287
    %314 = vmatprep.subr.mxu0 0.0
    %315 = vmatpush1.msra.mxu0 %v288
    %316 = vmatprep.subr.mxu0 0.0
    %317 = vmatpush1.msra.mxu0 %v289
    %318 = vmatprep.subr.mxu0 0.0
    %319 = vmatpush1.msra.mxu0 %v290
    %320 = vmatprep.subr.mxu0 0.0
    %321 = vmatpush1.msra.mxu0 %v291
    %322 = vmatprep.subr.mxu0 0.0
    %323 = vmatpush1.msra.mxu0 %v292
    %324 = vmatprep.subr.mxu0 0.0
    %325 = vmatpush1.msra.mxu0 %v293
    %326 = vmatprep.subr.mxu0 0.0
    %327 = vmatpush1.msra.mxu0 %v294
    %328 = vmatprep.subr.mxu0 0.0
    %329 = vmatpush1.msra.mxu0 %v295
    %330 = vmatprep.subr.mxu0 0.0
    %331 = vmatpush1.msra.mxu0 %v296
    %332 = vmatprep.subr.mxu0 0.0
    %333 = vmatpush1.msra.mxu0 %v297
    %334 = vmatprep.subr.mxu0 0.0
    %335 = vmatpush1.msra.mxu0 0.0
    %336 = vmatprep.subr.mxu0 0.0
    %337 = vmatpush1.msra.mxu0 0.0
    %338 = vmatprep.subr.mxu0 0.0
    %339 = vmatpush1.msra.mxu0 0.0
    %340 = vmatprep.subr.mxu0 0.0
    %341 = vmatpush1.msra.mxu0 0.0
    %342 = vmatprep.subr.mxu0 0.0
    %343 = vmatpush1.msra.mxu0 0.0
    %344 = vmatprep.subr.mxu0 0.0
    %345 = vmatpush1.msra.mxu0 0.0
    %346 = vmatprep.subr.mxu0 0.0
    %347 = vmatpush1.msra.mxu0 0.0
    %348 = vmatprep.subr.mxu0 0.0
    %349 = vmatpush1.msra.mxu0 0.0
    %350 = vmatprep.subr.mxu0 0.0
    %351 = vmatpush1.msra.mxu0 0.0
    %352 = vmatprep.subr.mxu0 0.0
    %353 = vmatpush1.msra.mxu0 0.0
    %354 = vmatprep.subr.mxu0 0.0
    %355 = vmatpush1.msra.mxu0 0.0
    %356 = vmatprep.subr.mxu0 0.0
    %357 = vmatpush1.msra.mxu0 0.0
    %358 = vmatprep.subr.mxu0 0.0
    %359 = vmatpush1.msra.mxu0 0.0
    %360 = vmatprep.subr.mxu0 0.0
    %361 = vmatpush1.msra.mxu0 0.0
    %362 = vmatprep.subr.mxu0 0.0
    %363 = vmatpush1.msra.mxu0 0.0
    %364 = vmatprep.subr.mxu0 0.0
    %365 = vmatpush1.msra.mxu0 0.0
    %366 = vmatprep.mubr.f32.mxu0 0.0
    %367 = vmatmul.mubr.f32.gmra.mrb[0].mxu0 %v281
    %v368 = vpop.f32.mrb[0].mxu0
    %v369 = vadd.f32 %v301, %v368
    %v370 = vpop.f32.mrb[0].mxu0
    %371 = vdwg.mxu0
    %372 = vst [vmem:[#allocation11] sm:$0xff] %v369
    %v373 = vld [vmem:[%s4] sm:$0xff]
    %v374 = vld [vmem:[#allocation10] sm:$0xff]
    %v375 = vld [vmem:[#allocation10 + $0x8] sm:$0xff]
    %v376 = vld [vmem:[#allocation10 + $0x10] sm:$0xff]
    %v377 = vld [vmem:[#allocation10 + $0x18] sm:$0xff]
    %v378 = vld [vmem:[#allocation10 + $0x20] sm:$0xff]
    %v379 = vld [vmem:[#allocation10 + $0x28] sm:$0xff]
    %v380 = vld [vmem:[#allocation10 + $0x30] sm:$0xff]
    %v381 = vld [vmem:[#allocation10 + $0x38] sm:$0xff]
    %v382 = vld [vmem:[#allocation10 + $0x40] sm:$0xff]
    %v383 = vld [vmem:[#allocation10 + $0x48] sm:$0xff]
    %v384 = vld [vmem:[#allocation10 + $0x50] sm:$0xff]
    %v385 = vld [vmem:[#allocation10 + $0x58] sm:$0xff]
    %v386 = vld [vmem:[#allocation10 + $0x60] sm:$0xff]
    %v387 = vld [vmem:[#allocation10 + $0x68] sm:$0xff]
    %v388 = vld [vmem:[#allocation10 + $0x70] sm:$0xff]
    %v389 = vld [vmem:[#allocation10 + $0x78] sm:$0xff]
    %v390 = vlaneseq
    %v391 = vshrl.u32 %v390, 7
    %v392 = vsub.s32 0, %v391
    %v393 = vrot.slane %v99, %v392
    %394 = vmatprep.subr.mxu0 0.0
    %395 = vmatpush1.msra.mxu0 %v374
    %396 = vmatprep.subr.mxu0 0.0
    %397 = vmatpush1.msra.mxu0 %v375
    %398 = vmatprep.subr.mxu0 0.0
    %399 = vmatpush1.msra.mxu0 %v376
    %400 = vmatprep.subr.mxu0 0.0
    %401 = vmatpush1.msra.mxu0 %v377
    %402 = vmatprep.subr.mxu0 0.0
    %403 = vmatpush1.msra.mxu0 %v378
    %404 = vmatprep.subr.mxu0 0.0
    %405 = vmatpush1.msra.mxu0 %v379
    %406 = vmatprep.subr.mxu0 0.0
    %407 = vmatpush1.msra.mxu0 %v380
    %408 = vmatprep.subr.mxu0 0.0
    %409 = vmatpush1.msra.mxu0 %v381
    %410 = vmatprep.subr.mxu0 0.0
    %411 = vmatpush1.msra.mxu0 %v382
    %412 = vmatprep.subr.mxu0 0.0
    %413 = vmatpush1.msra.mxu0 %v383
    %414 = vmatprep.subr.mxu0 0.0
    %415 = vmatpush1.msra.mxu0 %v384
    %416 = vmatprep.subr.mxu0 0.0
    %417 = vmatpush1.msra.mxu0 %v385
    %418 = vmatprep.subr.mxu0 0.0
    %419 = vmatpush1.msra.mxu0 %v386
    %420 = vmatprep.subr.mxu0 0.0
    %421 = vmatpush1.msra.mxu0 %v387
    %422 = vmatprep.subr.mxu0 0.0
    %423 = vmatpush1.msra.mxu0 %v388
    %424 = vmatprep.subr.mxu0 0.0
    %425 = vmatpush1.msra.mxu0 %v389
    %426 = vmatprep.subr.mxu0 0.0
    %427 = vmatpush1.msra.mxu0 0.0
    %428 = vmatprep.subr.mxu0 0.0
    %429 = vmatpush1.msra.mxu0 0.0
    %430 = vmatprep.subr.mxu0 0.0
    %431 = vmatpush1.msra.mxu0 0.0
    %432 = vmatprep.subr.mxu0 0.0
    %433 = vmatpush1.msra.mxu0 0.0
    %434 = vmatprep.subr.mxu0 0.0
    %435 = vmatpush1.msra.mxu0 0.0
    %436 = vmatprep.subr.mxu0 0.0
    %437 = vmatpush1.msra.mxu0 0.0
    %438 = vmatprep.subr.mxu0 0.0
    %439 = vmatpush1.msra.mxu0 0.0
    %440 = vmatprep.subr.mxu0 0.0
    %441 = vmatpush1.msra.mxu0 0.0
    %442 = vmatprep.subr.mxu0 0.0
    %443 = vmatpush1.msra.mxu0 0.0
    %444 = vmatprep.subr.mxu0 0.0
    %445 = vmatpush1.msra.mxu0 0.0
    %446 = vmatprep.subr.mxu0 0.0
    %447 = vmatpush1.msra.mxu0 0.0
    %448 = vmatprep.subr.mxu0 0.0
    %449 = vmatpush1.msra.mxu0 0.0
    %450 = vmatprep.subr.mxu0 0.0
    %451 = vmatpush1.msra.mxu0 0.0
    %452 = vmatprep.subr.mxu0 0.0
    %453 = vmatpush1.msra.mxu0 0.0
    %454 = vmatprep.subr.mxu0 0.0
    %455 = vmatpush1.msra.mxu0 0.0
    %456 = vmatprep.subr.mxu0 0.0
    %457 = vmatpush1.msra.mxu0 0.0
    %458 = vmatprep.mubr.f32.mxu0 0.0
    %459 = vmatmul.mubr.f32.gmra.mrb[0].mxu0 %v373
    %v460 = vpop.f32.mrb[0].mxu0
    %v461 = vadd.f32 %v393, %v460
    %v462 = vpop.f32.mrb[0].mxu0
    %463 = vdwg.mxu0
    %464 = vst [vmem:[#allocation12] sm:$0xff] %v461
    // Predicated region
    $region50: #{tpu_custom_call.1} parent=1 // pred_check
      _
    $region51: #{tpu_custom_call.1} parent=1 // pred_check_branch
      %466 = sbr.rel (0) target = $region53
    $region52: #{tpu_custom_call.1} parent=1 // pred_region
      %s468 = ssub.s32 128, 128
      %469 = vsyncadd [#allocation4], %s468
      %s471 = sshll.u32 [#allocation11], 4
      %s472 = int_to_ptr.vmem [resolvable:$true] %s471
      %474 = dma.vmem_to_hbm [thread:$0]  %s472, 128, %s7, [#allocation4]
    $region53: #{tpu_custom_call.1} parent=1 // pred_fallthru
      _
    // Predicated region
    $region54: #{tpu_custom_call.1} parent=1 // pred_check
      _
    $region55: #{tpu_custom_call.1} parent=1 // pred_check_branch
      %476 = sbr.rel (0) target = $region57
    $region56: #{tpu_custom_call.1} parent=1 // pred_region
      %s478 = ssub.s32 128, 128
      %479 = vsyncadd [#allocation13], %s478
      %s481 = sshll.u32 [#allocation12], 4
      %s482 = int_to_ptr.vmem [resolvable:$true] %s481
      %484 = dma.vmem_to_hbm [thread:$0]  %s482, 128, %s8, [#allocation13]
    $region57: #{tpu_custom_call.1} parent=1 // pred_fallthru
      _
    // Predicated region
    $region58: #{tpu_custom_call.1} parent=1 // pred_check
      _
    $region59: #{tpu_custom_call.1} parent=1 // pred_check_branch
      %486 = sbr.rel (0) target = $region61
    $region60: #{tpu_custom_call.1} parent=1 // pred_region
      %487 = dma.done [#allocation4], 128
    $region61: #{tpu_custom_call.1} parent=1 // pred_fallthru
      _
    // Predicated region
    $region62: #{tpu_custom_call.1} parent=1 // pred_check
      _
    $region63: #{tpu_custom_call.1} parent=1 // pred_check_branch
      %489 = sbr.rel (0) target = $region65
    $region64: #{tpu_custom_call.1} parent=1 // pred_region
      %490 = dma.done [#allocation13], 128
    $region65: #{tpu_custom_call.1} parent=1 // pred_fallthru
      _
    %491 = vsyncpa [#allocation3], 1
    %492 = vsyncpa [#allocation6], 1
    %493 = vsyncpa [#allocation9], 1
    %494 = vsyncpa [#allocation4], 1
    %495 = vsyncpa [#allocation13], 1

</llo_original>
